<compile_context>
chip_gen: v5e
topology: v5e:2x2
jax: 0.10.0
libtpu: 0.0.40
codegen_flags: <defaults>
</compile_context>

<pallas_src>
import functools

import jax
import jax.numpy as jnp
from jax.experimental import pallas as pl
from jax.experimental.pallas import tpu as pltpu


def _round_up(x, m):
    return ((x + m - 1) // m) * m


def _weighted_l1_kernel(w_ref, yz_ref, out_ref, *, nc, m_total):
    """w_ref: (nc,) f32 in SMEM (scalar prefetch).
    yz_ref: (2*nc, TM) class-major block; rows [0, nc) are y, [nc, 2nc) are z.
    out_ref: (1, 1, 128) lane-dense per-tile partial sums."""
    blk = yz_ref[...].astype(jnp.float32)          # (2*nc, TM)
    tm = blk.shape[1]
    y = blk[0:nc, :]                               # (nc, TM)
    z = blk[nc:2 * nc, :]                          # (nc, TM)

    # L1 distance per column, summed over the small class/sublane axis.
    l1 = jnp.sum(jnp.abs(y - z), axis=0, keepdims=True)          # (1, TM)

    # torch.max(y, 1)[1] == index of the FIRST maximum along the class axis.
    # Running max/select chain over the nc sublanes: strict '>' preserves
    # first-max tie-breaking and avoids iota / index temporaries.
    run_max = y[0:1, :]                                          # (1, TM)
    w_col = jnp.full((1, tm), w_ref[0], dtype=jnp.float32)       # (1, TM)
    for c in range(1, nc):                       # nc is small & static
        yc = y[c:c + 1, :]
        take = yc > run_max
        w_col = jnp.where(take, w_ref[c], w_col)
        run_max = jnp.maximum(run_max, yc)

    contrib = w_col * l1                                         # (1, TM)

    # Ragged last tile: columns beyond the logical M hold garbage (the block
    # overruns the array); zero their contribution with a lane mask.
    col = (pl.program_id(0) * tm
           + jax.lax.broadcasted_iota(jnp.int32, (1, tm), 1))
    contrib = jnp.where(col < m_total, contrib, 0.0)

    # Fold the TM lanes into a lane-dense (1, 128) partial using plain vreg
    # adds (a few parallel accumulators keep the dependence chain short); the
    # final cross-lane + cross-tile reduce and negation happen in JAX.
    n_chunks = tm // 128
    n_acc = min(4, n_chunks)
    accs = [contrib[:, k * 128:(k + 1) * 128] for k in range(n_acc)]
    for k in range(n_acc, n_chunks):
        accs[k % n_acc] = accs[k % n_acc] + contrib[:, k * 128:(k + 1) * 128]
    acc = accs[0]
    for a in accs[1:]:
        acc = acc + a
    out_ref[...] = acc.reshape(1, 1, 128)


def weighted_l1_loss(yz, w_param, n_classes, *, block_lanes=None,
                     target_block_bytes=1 << 20, min_tiles=8):
    """Pallas-backed equivalent of WeightedL1Loss.forward(yz)."""
    N, C = yz.shape
    nc = n_classes
    n_pairs = (C // nc) // 2
    M = N * n_pairs
    rows = 2 * nc

    # Free reshape + ONE transpose builds the combined class-major array:
    #   (N, n_pairs, 2, nc) -> (2, nc, n_pairs, N) -> (2*nc, M)
    # combined[c, m]      = y[m, c]   (c <  nc)
    # combined[nc + c, m] = z[m, c]
    # Column order (p*N + n) is a permutation of torch's cat order, which the
    # final scalar sum (and the per-column argmax/weight) is invariant to.
    yz4 = yz.reshape(N, n_pairs, 2, nc)
    yzT = jnp.transpose(yz4, (2, 3, 1, 0)).reshape(rows, M)

    # softmax over the class axis of the (nc, 1) parameter -> (nc,) f32 scalars
    # delivered to the kernel via scalar prefetch (SMEM).
    w_soft = jax.nn.softmax(w_param.astype(jnp.float32), axis=0).reshape(nc)

    # --- Tile sizing (accounts for sublane padding of the 2*nc rows) ---------
    itemsize = jnp.dtype(yz.dtype).itemsize
    pad_rows = _round_up(rows, 8)
    if block_lanes is None:
        block_lanes = max(
            128, (target_block_bytes // (pad_rows * itemsize)) // 128 * 128)
    else:
        block_lanes = max(128, _round_up(block_lanes, 128))
    # Keep at least `min_tiles` grid steps so both v7x TensorCores and the
    # DMA/compute pipeline are used even for moderate M.
    tm_split = _round_up(pl.cdiv(M, max(1, min_tiles)), 128)
    tm = max(128, min(block_lanes, tm_split))
    num_tiles = pl.cdiv(M, tm)

    block_bytes = pad_rows * tm * itemsize
    # 2 pipeline buffers for the input block + room for in-kernel f32
    # temporaries; explicit so v5e's 16 MiB scoped default is not a surprise.
    vmem_limit = int(min(32 * 1024 * 1024,
                         max(16 * 1024 * 1024, 8 * block_bytes)))

    kernel = functools.partial(_weighted_l1_kernel, nc=nc, m_total=M)

    partials = pl.pallas_call(
        kernel,
        out_shape=jax.ShapeDtypeStruct((num_tiles, 1, 128), jnp.float32),
        grid_spec=pltpu.PrefetchScalarGridSpec(
            num_scalar_prefetch=1,            # w_soft -> SMEM
            grid=(num_tiles,),
            in_specs=[pl.BlockSpec((rows, tm), lambda i, w: (0, i))],
            out_specs=pl.BlockSpec((1, 1, 128), lambda i, w: (i, 0, 0)),
        ),
        compiler_params=pltpu.CompilerParams(
            dimension_semantics=("parallel",),
            vmem_limit_bytes=vmem_limit),
    )(w_soft, yzT)

    # Tiny cross-tile + cross-lane reduction and negation in plain JAX.
    return -jnp.sum(partials)


def _reference(yz, w_param, n_classes):
    """Pure-JAX replica of the PyTorch forward, for verification."""
    chunks = jnp.split(yz, yz.shape[1] // n_classes, axis=1)
    y = jnp.concatenate(chunks[::2], axis=0)
    z = jnp.concatenate(chunks[1::2], axis=0)
    w_soft = jax.nn.softmax(w_param, axis=0)     # (n_classes, 1)
    idx = jnp.argmax(y, axis=1)                  # (M,)
    w = w_soft[idx]                              # (M, 1)
    return -jnp.sum(w * jnp.abs(y - z))


if __name__ == "__main__":
    n_classes = 4
    N, C = 48, 32          # 8 chunks of n_classes -> y, z each (192, 4)

    key = jax.random.PRNGKey(0)
    yz = jax.random.normal(key, (N, C), dtype=jnp.float32)

    # Deterministic parameter init, exactly as in __init__: ones(n_classes, 1).
    w_param = jnp.ones((n_classes, 1), dtype=jnp.float32)

    # Default path: multi-tile parallel grid with an in-kernel masked ragged
    # last tile (M = 192 is not a multiple of the 128-lane tile).
    loss = jax.block_until_ready(weighted_l1_loss(yz, w_param, n_classes))
    # Forced single-tile path (tile wider than M) to exercise the mask on a
    # block that overruns the whole array.
    loss_single = jax.block_until_ready(
        weighted_l1_loss(yz, w_param, n_classes, min_tiles=1))

    ref = jax.block_until_ready(_reference(yz, w_param, n_classes))
    assert jnp.allclose(loss, ref, rtol=1e-5, atol=1e-5), (loss, ref)
    assert jnp.allclose(loss_single, ref, rtol=1e-5, atol=1e-5), (loss_single, ref)

    print("KERNEL_OK")
</pallas_src>

<mosaic_0001>
module attributes {stable_mosaic.version = 11 : i64} {
  func.func @_weighted_l1_kernel(%arg0: i32, %arg1: memref<4xf32, #tpu.memory_space<smem>>, %arg2: memref<8x128xf32, #tpu.memory_space<vmem>>, %arg3: memref<1x1x128xf32, #tpu.memory_space<vmem>>) attributes {dimension_semantics = [#tpu.dimension_semantics<parallel>], iteration_bounds = array<i64: 2>, scalar_prefetch = 1 : i64, scratch_operands = 0 : i64, tpu.core_type = #tpu.core_type<tc>, window_params = [{transform_indices = @transform_0, window_bounds = array<i64: 8, 128>}, {transform_indices = @transform_1, window_bounds = array<i64: 1, 1, 128>}]} {
    %c0 = arith.constant 0 : index
    %c0_0 = arith.constant 0 : index
    %0 = vector.load %arg2[%c0, %c0_0] : memref<8x128xf32, #tpu.memory_space<vmem>>, vector<8x128xf32>
    %1 = vector.extract_strided_slice %0 {offsets = [0, 0], sizes = [4, 128], strides = [1, 1]} : vector<8x128xf32> to vector<4x128xf32>
    %2 = vector.extract_strided_slice %0 {offsets = [4, 0], sizes = [4, 128], strides = [1, 1]} : vector<8x128xf32> to vector<4x128xf32>
    %3 = arith.subf %1, %2 : vector<4x128xf32>
    %4 = math.absf %3 : vector<4x128xf32>
    %cst = arith.constant dense<0.000000e+00> : vector<128xf32>
    %5 = vector.multi_reduction <add>, %4, %cst [0] : vector<4x128xf32> to vector<128xf32>
    %6 = vector.shape_cast %5 : vector<128xf32> to vector<1x128xf32>
    %7 = vector.extract_strided_slice %1 {offsets = [0, 0], sizes = [1, 128], strides = [1, 1]} : vector<4x128xf32> to vector<1x128xf32>
    %c0_1 = arith.constant 0 : index
    %8 = memref.load %arg1[%c0_1] : memref<4xf32, #tpu.memory_space<smem>>
    %9 = vector.broadcast %8 : f32 to vector<1x128xf32>
    %10 = vector.extract_strided_slice %1 {offsets = [1, 0], sizes = [1, 128], strides = [1, 1]} : vector<4x128xf32> to vector<1x128xf32>
    %11 = arith.cmpf ogt, %10, %7 : vector<1x128xf32>
    %c1 = arith.constant 1 : index
    %12 = memref.load %arg1[%c1] : memref<4xf32, #tpu.memory_space<smem>>
    %13 = vector.broadcast %12 : f32 to vector<1x128xf32>
    %14 = arith.select %11, %13, %9 : vector<1x128xi1>, vector<1x128xf32>
    %15 = arith.maximumf %7, %10 : vector<1x128xf32>
    %16 = vector.extract_strided_slice %1 {offsets = [2, 0], sizes = [1, 128], strides = [1, 1]} : vector<4x128xf32> to vector<1x128xf32>
    %17 = arith.cmpf ogt, %16, %15 : vector<1x128xf32>
    %c2 = arith.constant 2 : index
    %18 = memref.load %arg1[%c2] : memref<4xf32, #tpu.memory_space<smem>>
    %19 = vector.broadcast %18 : f32 to vector<1x128xf32>
    %20 = arith.select %17, %19, %14 : vector<1x128xi1>, vector<1x128xf32>
    %21 = arith.maximumf %15, %16 : vector<1x128xf32>
    %22 = vector.extract_strided_slice %1 {offsets = [3, 0], sizes = [1, 128], strides = [1, 1]} : vector<4x128xf32> to vector<1x128xf32>
    %23 = arith.cmpf ogt, %22, %21 : vector<1x128xf32>
    %c3 = arith.constant 3 : index
    %24 = memref.load %arg1[%c3] : memref<4xf32, #tpu.memory_space<smem>>
    %25 = vector.broadcast %24 : f32 to vector<1x128xf32>
    %26 = arith.select %23, %25, %20 : vector<1x128xi1>, vector<1x128xf32>
    %27 = arith.mulf %26, %6 : vector<1x128xf32>
    %c128_i32 = arith.constant 128 : i32
    %28 = arith.muli %arg0, %c128_i32 : i32
    %29 = tpu.iota {dimensions = array<i32: 1>} : vector<1x128xi32>
    %30 = vector.broadcast %28 : i32 to vector<1x128xi32>
    %31 = arith.addi %30, %29 : vector<1x128xi32>
    %c192_i32 = arith.constant 192 : i32
    %32 = vector.broadcast %c192_i32 : i32 to vector<1x128xi32>
    %33 = arith.cmpi slt, %31, %32 : vector<1x128xi32>
    %cst_2 = arith.constant 0.000000e+00 : f32
    %34 = vector.broadcast %cst_2 : f32 to vector<1x128xf32>
    %35 = arith.select %33, %27, %34 : vector<1x128xi1>, vector<1x128xf32>
    %36 = vector.shape_cast %35 : vector<1x128xf32> to vector<1x1x128xf32>
    %c0_3 = arith.constant 0 : index
    %c0_4 = arith.constant 0 : index
    %c0_5 = arith.constant 0 : index
    %37 = vector.load %arg3[%c0_3, %c0_4, %c0_5] : memref<1x1x128xf32, #tpu.memory_space<vmem>>, vector<1x1x128xf32>
    tpu.vector_store %arg3[%c0_3, %c0_4, %c0_5], %36 {strides = array<i32>} : memref<1x1x128xf32, #tpu.memory_space<vmem>>, vector<1x1x128xf32>,
    return
  }
  func.func @transform_0(%arg0: i32, %arg1: memref<4xf32, #tpu.memory_space<smem>>) -> (i32, i32) {
    %c0_i32 = arith.constant 0 : i32
    %c0_i32_0 = arith.constant 0 : i32
    return %c0_i32, %arg0 : i32, i32
  }
  func.func @transform_1(%arg0: i32, %arg1: memref<4xf32, #tpu.memory_space<smem>>) -> (i32, i32, i32) {
    %c0_i32 = arith.constant 0 : i32
    %c0_i32_0 = arith.constant 0 : i32
    %c0_i32_1 = arith.constant 0 : i32
    return %arg0, %c0_i32, %c0_i32_0 : i32, i32, i32
  }
}

</mosaic_0001>

<llo_original>
// kernel: tpu_custom_call.1
$region0: #{tpu_custom_call.1}
  #allocation0 [shape = 'u32[]', space=smem, size = 0x4, offset = 0x4, fixed_abs, tag = 'smem constant byte address 0x4 - core index']
  #allocation1 [shape = 'u32[72,128]{1,0:T(1,128)}', space=vmem, size = 0x9000, scoped, tag = 'internal scratch']
  #allocation2 [shape = 's32[1]{0}', space=sflag, size = 0x4, scoped, tag = 'scoped memory for tpu_custom_call.1']
  #allocation3 [shape = 'u8[512]{0}', space=smem, size = 0x200, scoped, tag = 'prefetched SMEM operand 0']
  %s0 = inlined_call_operand.hbm [shape: f32[4], index: 0, kind: input, shape index: {}]
  %s1 = inlined_call_operand.hbm [shape: f32[8,192], index: 1, kind: input, shape index: {}]
  %s2 = inlined_call_operand.hbm [shape: f32[2,1,128], index: 2, kind: output, shape index: {}]
  %s3 = sld [smem:[#allocation0]]
  $region41: #{tpu_custom_call.1} parent=0
    _
  %s5 = ssub.s32 1, %s3
  %s6 = scalar_select 0, %s5, %s3
  %s8 = sshll.u32 %s0, 4
  %s9 = int_to_ptr.hbm [resolvable:$true] %s8
  %11 = dma.hbm_to_smem %s9, 16, [#allocation3], [#allocation2]
  %13 = dma.done [#allocation2], 16
  %14 = sfence
  $region1: #{tpu_custom_call.1} parent=0
    #allocation4 [shape = 'u8[8192]{0}', space=vmem, size = 0x2000, scoped, tag = 'input window, operand 1']
    #allocation5 [shape = 's32[2]{0}', space=sflag, size = 0x8, scoped, tag = 'scoped memory for tpu_custom_call.1']
    #allocation6 [shape = 's32[2]{0}', space=sflag, size = 0x8, scoped, tag = 'scoped memory for tpu_custom_call.1']
    #allocation7 [shape = 'u8[1024]{0}', space=vmem, size = 0x400, scoped, tag = 'output window, operand 0']
    %15 = vsyncpa [#allocation5], 0
    %s16 = scalar_lea.sflag [#allocation5], 1
    %17 = vsyncpa %s16, 0
    %18 = vsyncpa [#allocation6], 0
    %s19 = scalar_lea.sflag [#allocation6], 1
    %20 = vsyncpa %s19, 0
    loop: start=0, step=1, limit=4
    $region2: #{tpu_custom_call.1} parent=1 // loop_pre_header
      _
    $region3: #{tpu_custom_call.1} parent=1 // loop_header
      %s22 = sphi 0, %s26
      %p23 = scmp.ge.s32.totalorder %s22, 4
      %s32 = sphi 0, %s34
      %s35 = sphi 0, %s32
      %s36 = sphi 0, %s35
      %s52 = sphi 0, %s36
      %s58 = sphi 0, %s60
      %s61 = sphi 0, %s58
      %s62 = sphi 0, %s61
      %s78 = sphi 0, %s62
    $region4: #{tpu_custom_call.1} parent=1 // loop_header_branch
      %25 = sbr.rel (%p23) target = $region8
    $region5: #{tpu_custom_call.1} parent=1 // loop_body
      %s27 = ssub.s32 %s22, 1
      %s28 = ssub.s32 %s22, 2
      %s29 = sadd.s32 %s22, 1
      %s30 = ssub.s32 %s22, %s29
      %p31 = scmp.eq.s32.totalorder %s30, 0
      %s33 = sadd.s32 %s32, 1
      %s34 = scalar_select %p31, %s32, %s33
      %p37 = pneg %p31
      %p38 = scmp.eq.s32.totalorder %s22, 1
      %p39 = por %p37, %p38
      %p40 = scmp.ne.s32.totalorder %s32, %s35
      %p41 = scmp.eq.s32.totalorder %s22, 0
      %p42 = por %p40, %p41
      %p43 = scmp.ne.s32.totalorder %s32, %s35
      %p44 = scmp.eq.s32.totalorder %s27, 1
      %p45 = por %p43, %p44
      %p46 = scmp.ne.s32.totalorder %s35, %s36
      %p47 = scmp.eq.s32.totalorder %s27, 0
      %p48 = por %p46, %p47
      %p49 = scmp.ne.s32.totalorder %s35, %s36
      %p50 = scmp.eq.s32.totalorder %s28, 1
      %p51 = por %p49, %p50
      %p53 = scmp.ne.s32.totalorder %s36, %s52
      %p54 = scmp.eq.s32.totalorder %s28, 0
      %p55 = por %p53, %p54
      %s56 = ssub.s32 %s22, %s29
      %p57 = scmp.eq.s32.totalorder %s56, 0
      %s59 = sadd.s32 %s58, 1
      %s60 = scalar_select %p57, %s58, %s59
      %p63 = pneg %p57
      %p64 = scmp.eq.s32.totalorder %s22, 1
      %p65 = por %p63, %p64
      %p66 = scmp.ne.s32.totalorder %s58, %s61
      %p67 = scmp.eq.s32.totalorder %s22, 0
      %p68 = por %p66, %p67
      %p69 = scmp.ne.s32.totalorder %s58, %s61
      %p70 = scmp.eq.s32.totalorder %s27, 1
      %p71 = por %p69, %p70
      %p72 = scmp.ne.s32.totalorder %s61, %s62
      %p73 = scmp.eq.s32.totalorder %s27, 0
      %p74 = por %p72, %p73
      %p75 = scmp.ne.s32.totalorder %s61, %s62
      %p76 = scmp.eq.s32.totalorder %s28, 1
      %p77 = por %p75, %p76
      %p79 = scmp.ne.s32.totalorder %s62, %s78
      %p80 = scmp.eq.s32.totalorder %s28, 0
      %p81 = por %p79, %p80
      %p82 = scmp.le.s32.totalorder 1, %s22
      %p83 = scmp.lt.s32.totalorder %s22, 3
      %p84 = pnand %p82, %p83
      %p85 = pneg %p84
      // Predicated region
      $region9: #{tpu_custom_call.1} parent=5 // pred_check
        _
      $region10: #{tpu_custom_call.1} parent=5 // pred_check_branch
        %87 = sbr.rel (%p84) target = $region12
      $region11: #{tpu_custom_call.1} parent=5 // pred_region
        %s88 = ssub.s32 %s22, 1
      $region12: #{tpu_custom_call.1} parent=5 // pred_fallthru
        _
      %p89 = scmp.lt.s32.totalorder %s22, 2
      // Predicated region
      $region13: #{tpu_custom_call.1} parent=5 // pred_check
        %p90 = pneg %p89
      $region14: #{tpu_custom_call.1} parent=5 // pred_check_branch
        %92 = sbr.rel (%p90) target = $region16
      $region15: #{tpu_custom_call.1} parent=5 // pred_region
        // Predicated region
        $region17: #{tpu_custom_call.1} parent=15 // pred_check
          %p93 = pneg %p42
        $region18: #{tpu_custom_call.1} parent=15 // pred_check_branch
          %95 = sbr.rel (%p93) target = $region20
        $region19: #{tpu_custom_call.1} parent=15 // pred_region
          %s96 = sand.u32 %s32, 1
          %s97 = scalar_lea.sflag [#allocation5], %s96
          %s98 = sand.u32 %s32, 1
          %s99 = smul.addr %s98, 8
          %s100 = scalar_lea.vmem [#allocation4], %s99
          %102 = vsyncadd %s97, 0
          %s103 = smul.addr %s22, 8
          %s104 = scalar_lea.hbm %s1, %s103
          %s106 = sshll.u32 %s104, 4
          %s107 = int_to_ptr.hbm [resolvable:$true] %s106
          %s108 = sshll.u32 %s100, 4
          %s109 = int_to_ptr.vmem [resolvable:$true] %s108
          %111 = dma.hbm_to_vmem [thread:$0]  %s107, 128, %s109, %s97
        $region20: #{tpu_custom_call.1} parent=15 // pred_fallthru
          _
      $region16: #{tpu_custom_call.1} parent=5 // pred_fallthru
        _
      %p112 = scmp.le.s32.totalorder 1, %s22
      %p113 = scmp.lt.s32.totalorder %s22, 3
      %p114 = pnand %p112, %p113
      %p115 = pneg %p114
      // Predicated region
      $region21: #{tpu_custom_call.1} parent=5 // pred_check
        _
      $region22: #{tpu_custom_call.1} parent=5 // pred_check_branch
        %117 = sbr.rel (%p114) target = $region24
      $region23: #{tpu_custom_call.1} parent=5 // pred_region
        %s118 = ssub.s32 %s22, 1
        %s119 = sand.u32 %s35, 1
        %s120 = scalar_lea.sflag [#allocation5], %s119
        %s121 = sand.u32 %s35, 1
        %s122 = smul.addr %s121, 8
        %s123 = scalar_lea.vmem [#allocation4], %s122
        // Predicated region
        $region25: #{tpu_custom_call.1} parent=23 // pred_check
          %p124 = pneg %p48
        $region26: #{tpu_custom_call.1} parent=23 // pred_check_branch
          %126 = sbr.rel (%p124) target = $region28
        $region27: #{tpu_custom_call.1} parent=23 // pred_region
          %128 = dma.done %s120, 128
        $region28: #{tpu_custom_call.1} parent=23 // pred_fallthru
          _
        %s129 = sand.u32 %s35, 1
        %s130 = scalar_lea.sflag [#allocation5], %s129
        %s131 = sand.u32 %s35, 1
        %s132 = smul.addr %s131, 8
        %s133 = scalar_lea.vmem [#allocation4], %s132
        %p134 = pneg %p48
        %p135 = pneg %p45
        %p136 = pneg %p74
        %p137 = pneg %p71
        %s138 = sand.u32 %s61, 1
        %s139 = scalar_lea.sflag [#allocation6], %s138
        %s140 = sand.u32 %s61, 1
        %s141 = scalar_lea.vmem [#allocation7], %s140
        %v142 = vld [vmem:[%s123] sm:$0xff]
        %v144 = vrot.slane %v142, 4
        %v146 = vsub.f32 %v142, %v144
        %v147 = vand.u32 2147483647, %v146
        %vm148 = vcmask 1043456
        %v149 = vsel %vm148, %v147, 0.0
        %v150 = vrot.slane %v149, 4
        %v151 = vadd.f32 %v149, %v150
        %v152 = vrot.slane %v151, 2
        %v153 = vadd.f32 %v151, %v152
        %v154 = vrot.slane %v153, 1
        %v155 = vadd.f32 %v153, %v154
        %s156 = sld [smem:[#allocation3]]
        %v157 = vstv %s156
        %v158 = vrot.slane %v142, 7
        %vm160 = vcmp.gt.f32.partialorder %v142, %v158
        %s161 = sld [smem:[#allocation3 + $0x1]]
        %v162 = vstv %s161
        %v163 = vsel %vm160, %v162, %v157
        %v164 = vrot.slane %v142, 1
        %v166 = vmax.f32 %v142, %v164
        %v168 = vrot.slane %v166, 6
        %vm170 = vcmp.gt.f32.partialorder %v142, %v168
        %s171 = sld [smem:[#allocation3 + $0x2]]
        %v172 = vstv %s171
        %v174 = vrot.slane %v163, 7
        %v176 = vsel %vm170, %v172, %v174
        %v177 = vrot.slane %v142, 2
        %v179 = vmax.f32 %v166, %v177
        %v181 = vrot.slane %v179, 5
        %vm183 = vcmp.gt.f32.partialorder %v142, %v181
        %s184 = sld [smem:[#allocation3 + $0x3]]
        %v185 = vstv %s184
        %v187 = vrot.slane %v176, 7
        %v189 = vsel %vm183, %v185, %v187
        %v190 = vmul.f32 %v189, %v155
        %s191 = smul.u32 %s27, 128
        %v192 = vlaneseq
        %v193 = vand.u32 %v192, 127
        %v194 = vstv %s191
        %v195 = vadd.s32 %v194, %v193
        %vm196 = vcmp.lt.s32.totalorder %v195, 192
        %v197 = vsel %vm196, %v190, 0.0
        %198 = vst [vmem:[%s141 - $0x3] sm:$0x8] %v197
        %s199 = sand.u32 %s61, 1
        %s200 = scalar_lea.sflag [#allocation6], %s199
        %s201 = sand.u32 %s61, 1
        %s202 = scalar_lea.vmem [#allocation7], %s201
        // Predicated region
        $region29: #{tpu_custom_call.1} parent=23 // pred_check
          %p203 = pneg %p71
        $region30: #{tpu_custom_call.1} parent=23 // pred_check_branch
          %205 = sbr.rel (%p203) target = $region32
        $region31: #{tpu_custom_call.1} parent=23 // pred_region
          %207 = vsyncadd %s200, 0
          %s208 = scalar_lea.hbm %s2, %s27
          %s210 = sshll.u32 %s202, 4
          %s211 = int_to_ptr.vmem [resolvable:$true] %s210
          %s212 = sshll.u32 %s208, 4
          %s213 = int_to_ptr.hbm [resolvable:$true] %s212
          %215 = dma.vmem_to_hbm [thread:$0]  %s211, 16, %s213, %s200
        $region32: #{tpu_custom_call.1} parent=23 // pred_fallthru
          _
      $region24: #{tpu_custom_call.1} parent=5 // pred_fallthru
        _
      %p216 = scmp.le.s32.totalorder 2, %s22
      // Predicated region
      $region33: #{tpu_custom_call.1} parent=5 // pred_check
        %p217 = pneg %p216
      $region34: #{tpu_custom_call.1} parent=5 // pred_check_branch
        %219 = sbr.rel (%p217) target = $region36
      $region35: #{tpu_custom_call.1} parent=5 // pred_region
        %s220 = ssub.s32 %s22, 2
        // Predicated region
        $region37: #{tpu_custom_call.1} parent=35 // pred_check
          %p221 = pneg %p77
        $region38: #{tpu_custom_call.1} parent=35 // pred_check_branch
          %223 = sbr.rel (%p221) target = $region40
        $region39: #{tpu_custom_call.1} parent=35 // pred_region
          %s224 = sand.u32 %s62, 1
          %s225 = scalar_lea.sflag [#allocation6], %s224
          %s226 = sand.u32 %s62, 1
          %s227 = scalar_lea.vmem [#allocation7], %s226
          %229 = dma.done %s225, 16
        $region40: #{tpu_custom_call.1} parent=35 // pred_fallthru
          _
      $region36: #{tpu_custom_call.1} parent=5 // pred_fallthru
        _
    $region6: #{tpu_custom_call.1} parent=1 // loop_footer
      %s26 = sadd.s32 1, %s22
    $region7: #{tpu_custom_call.1} parent=1 // loop_footer_branch
      %21 = sbr.rel target = $region3
    $region8: #{tpu_custom_call.1} parent=1 // loop_exit
      _
    %230 = vsyncpa [#allocation5], 1
    %s231 = scalar_lea.sflag [#allocation5], 1
    %232 = vsyncpa %s231, 1
    %233 = vsyncpa [#allocation6], 1
    %s234 = scalar_lea.sflag [#allocation6], 1
    %235 = vsyncpa %s234, 1

</llo_original>
